<compile_context>
chip_gen: v5e
topology: v5e:2x2
jax: 0.10.0
libtpu: 0.0.40
codegen_flags: <defaults>
</compile_context>

<pallas_src>
import jax
import jax.numpy as jnp
from jax.experimental import pallas as pl
from jax.experimental.pallas import tpu as pltpu

LANES = 128
SUBLANES = 8
BLOCK_ROWS_MAX = 4096      # (4096, 128) f32 = 2 MiB per input block
NUM_CORES_MAX = 2          # leading "parallel" axis (megacore on v7x)


def _round_up(v: int, m: int) -> int:
    return (v + m - 1) // m * m


def _make_mse_kernel(block_rows: int, tiles_per_core: int, rows_valid: int,
                     needs_mask: bool, needs_cast: bool):
    def mse_kernel(x_ref, y_ref, out_ref, acc_ref):
        c = pl.program_id(0)          # core / parallel axis
        i = pl.program_id(1)          # reduction axis over row tiles

        @pl.when(i == 0)
        def _():
            acc_ref[...] = jnp.zeros_like(acc_ref)

        if needs_cast:
            d = x_ref[...].astype(jnp.float32) - y_ref[...].astype(jnp.float32)
        else:
            d = x_ref[...] - y_ref[...]
        sq = d * d

        if needs_mask:
            # Zero rows past the end of the real (lane-padded) data: the
            # partial last block, or the clamped duplicate block an idle core
            # may re-read.  VALU has plenty of slack under the DMA roofline.
            block_idx = c * tiles_per_core + i
            local_row = jax.lax.broadcasted_iota(
                jnp.int32, (block_rows, LANES), 0)
            global_row = block_idx * block_rows + local_row
            sq = jnp.where(global_row < rows_valid, sq, 0.0)

        # Row-reduce the block down to one (8, 128) vreg tile: pure VPU adds.
        acc_ref[...] += sq.reshape(
            block_rows // SUBLANES, SUBLANES, LANES).sum(axis=0)

        @pl.when(i == pl.num_programs(1) - 1)
        def _():
            # Single expensive cross-lane/sublane reduce, once per core.
            out_ref[0, 0] = jnp.sum(acc_ref[...])

    return mse_kernel


def mse_loss_pallas(x: jax.Array, y: jax.Array) -> jax.Array:
    """Equivalent of torch.mean((x - y).pow(2)) — returns a float32 scalar."""
    assert x.shape == y.shape, "x and y must have the same shape"
    n = x.size
    assert n > 0

    # Flatten to a lane-dense (rows, 128) slab.  Reshape of a contiguous array
    # is free; a zero-pad (zero diff -> contributes 0) is only issued when
    # n % 128 != 0.
    xf = jnp.ravel(x)
    yf = jnp.ravel(y)
    n_pad = (-n) % LANES
    if n_pad:
        xf = jnp.pad(xf, (0, n_pad))
        yf = jnp.pad(yf, (0, n_pad))
    rows = (n + n_pad) // LANES
    x2 = xf.reshape(rows, LANES)
    y2 = yf.reshape(rows, LANES)

    block_rows = min(BLOCK_ROWS_MAX, _round_up(rows, SUBLANES))
    tiles_total = pl.cdiv(rows, block_rows)
    num_cores = max(1, min(NUM_CORES_MAX, tiles_total))
    tiles_per_core = pl.cdiv(tiles_total, num_cores)
    rows_covered = num_cores * tiles_per_core * block_rows
    needs_mask = rows_covered > rows
    needs_cast = (x2.dtype != jnp.float32) or (y2.dtype != jnp.float32)

    kernel = _make_mse_kernel(block_rows, tiles_per_core, rows,
                              needs_mask, needs_cast)

    in_index_map = lambda c, i: (c * tiles_per_core + i, 0)

    partials = pl.pallas_call(
        kernel,
        out_shape=jax.ShapeDtypeStruct((num_cores, 1), jnp.float32),
        grid_spec=pltpu.PrefetchScalarGridSpec(
            num_scalar_prefetch=0,
            grid=(num_cores, tiles_per_core),
            in_specs=[
                pl.BlockSpec((block_rows, LANES), in_index_map),
                pl.BlockSpec((block_rows, LANES), in_index_map),
            ],
            out_specs=pl.BlockSpec((1, 1), lambda c, i: (c, 0),
                                   memory_space=pltpu.SMEM),
            scratch_shapes=[pltpu.VMEM((SUBLANES, LANES), jnp.float32)],
        ),
        compiler_params=pltpu.CompilerParams(
            dimension_semantics=("parallel", "arbitrary"),
            vmem_limit_bytes=32 * 1024 * 1024,
        ),
    )(x2, y2)

    return jnp.sum(partials) / jnp.float32(n)


if __name__ == "__main__":
    keys = jax.random.split(jax.random.PRNGKey(0), 8)

    # 1) Primary test: small NCHW shape (lane-divisible, single tile, 1 core).
    x = jax.random.normal(keys[0], (2, 4, 16, 16), dtype=jnp.float32)
    y = jax.random.normal(keys[1], (2, 4, 16, 16), dtype=jnp.float32)
    loss = jax.block_until_ready(mse_loss_pallas(x, y))
    ref = jnp.mean((x - y) ** 2)
    assert jnp.allclose(loss, ref, rtol=1e-5, atol=1e-6), (loss, ref)

    # 2) Ragged element count exercising the lane zero-pad path.
    x2 = jax.random.normal(keys[2], (3, 5, 7, 9), dtype=jnp.float32)
    y2 = jax.random.normal(keys[3], (3, 5, 7, 9), dtype=jnp.float32)
    loss2 = jax.block_until_ready(mse_loss_pallas(x2, y2))
    ref2 = jnp.mean((x2 - y2) ** 2)
    assert jnp.allclose(loss2, ref2, rtol=1e-5, atol=1e-6), (loss2, ref2)

    # 3) Multi-tile, two-core split, no masking (rows divisible by block).
    x3 = jax.random.normal(keys[4], (8, 16, 128, 128), dtype=jnp.float32)
    y3 = jax.random.normal(keys[5], (8, 16, 128, 128), dtype=jnp.float32)
    loss3 = jax.block_until_ready(mse_loss_pallas(x3, y3))
    ref3 = jnp.mean((x3 - y3) ** 2)
    assert jnp.allclose(loss3, ref3, rtol=1e-5, atol=1e-6), (loss3, ref3)

    # 4) Multi-tile ragged 1-D: exercises pad + partial-last-block masking.
    x4 = jax.random.normal(keys[6], (525000,), dtype=jnp.float32)
    y4 = jax.random.normal(keys[7], (525000,), dtype=jnp.float32)
    loss4 = jax.block_until_ready(mse_loss_pallas(x4, y4))
    ref4 = jnp.mean((x4 - y4) ** 2)
    assert jnp.allclose(loss4, ref4, rtol=1e-5, atol=1e-6), (loss4, ref4)

    print("KERNEL_OK")
</pallas_src>

<mosaic_0001>
module attributes {stable_mosaic.version = 11 : i64} {
  func.func @mse_kernel(%arg0: i32, %arg1: i32, %arg2: memref<16x128xf32, #tpu.memory_space<vmem>>, %arg3: memref<16x128xf32, #tpu.memory_space<vmem>>, %arg4: memref<1x1xf32, #tpu.memory_space<smem>>, %arg5: memref<8x128xf32, #tpu.memory_space<vmem>>) attributes {dimension_semantics = [#tpu.dimension_semantics<parallel>, #tpu.dimension_semantics<arbitrary>], iteration_bounds = array<i64: 1, 1>, scalar_prefetch = 0 : i64, scratch_operands = 1 : i64, tpu.core_type = #tpu.core_type<tc>, window_params = [{transform_indices = @transform_0, window_bounds = array<i64: 16, 128>}, {transform_indices = @transform_1, window_bounds = array<i64: 16, 128>}, {transform_indices = @transform_2, window_bounds = array<i64: 1, 1>}]} {
    %c0_i32 = arith.constant 0 : i32
    %0 = arith.cmpi eq, %arg1, %c0_i32 : i32
    %1 = arith.extui %0 : i1 to i32
    %c0_i32_0 = arith.constant 0 : i32
    %2 = arith.cmpi ne, %1, %c0_i32_0 : i32
    scf.if %2 {
      %cst_10 = arith.constant 0.000000e+00 : f32
      %15 = vector.broadcast %cst_10 : f32 to vector<8x128xf32>
      %c0_11 = arith.constant 0 : index
      %c0_12 = arith.constant 0 : index
      %16 = vector.load %arg5[%c0_11, %c0_12] : memref<8x128xf32, #tpu.memory_space<vmem>>, vector<8x128xf32>
      tpu.vector_store %arg5[%c0_11, %c0_12], %15 {strides = array<i32>} : memref<8x128xf32, #tpu.memory_space<vmem>>, vector<8x128xf32>,
    } else {
    }
    %c0 = arith.constant 0 : index
    %c0_1 = arith.constant 0 : index
    %3 = vector.load %arg2[%c0, %c0_1] : memref<16x128xf32, #tpu.memory_space<vmem>>, vector<16x128xf32>
    %c0_2 = arith.constant 0 : index
    %c0_3 = arith.constant 0 : index
    %4 = vector.load %arg3[%c0_2, %c0_3] : memref<16x128xf32, #tpu.memory_space<vmem>>, vector<16x128xf32>
    %5 = arith.subf %3, %4 : vector<16x128xf32>
    %6 = arith.mulf %5, %5 : vector<16x128xf32>
    %c0_4 = arith.constant 0 : index
    %c0_5 = arith.constant 0 : index
    %7 = vector.load %arg5[%c0_4, %c0_5] : memref<8x128xf32, #tpu.memory_space<vmem>>, vector<8x128xf32>
    %8 = vector.shape_cast %6 : vector<16x128xf32> to vector<2x8x128xf32>
    %cst = arith.constant dense<0.000000e+00> : vector<8x128xf32>
    %9 = vector.multi_reduction <add>, %8, %cst [0] : vector<2x8x128xf32> to vector<8x128xf32>
    %10 = arith.addf %7, %9 : vector<8x128xf32>
    %c0_6 = arith.constant 0 : index
    %c0_7 = arith.constant 0 : index
    %11 = vector.load %arg5[%c0_6, %c0_7] : memref<8x128xf32, #tpu.memory_space<vmem>>, vector<8x128xf32>
    tpu.vector_store %arg5[%c0_6, %c0_7], %10 {strides = array<i32>} : memref<8x128xf32, #tpu.memory_space<vmem>>, vector<8x128xf32>,
    %c0_i32_8 = arith.constant 0 : i32
    %12 = arith.cmpi eq, %arg1, %c0_i32_8 : i32
    %13 = arith.extui %12 : i1 to i32
    %c0_i32_9 = arith.constant 0 : i32
    %14 = arith.cmpi ne, %13, %c0_i32_9 : i32
    scf.if %14 {
      %c0_10 = arith.constant 0 : index
      %c0_11 = arith.constant 0 : index
      %15 = vector.load %arg5[%c0_10, %c0_11] : memref<8x128xf32, #tpu.memory_space<vmem>>, vector<8x128xf32>
      %16 = vector.shape_cast %15 : vector<8x128xf32> to vector<1x8x128xf32>
      %cst_12 = arith.constant dense<0.000000e+00> : vector<1xf32>
      %17 = vector.multi_reduction <add>, %16, %cst_12 [1, 2] : vector<1x8x128xf32> to vector<1xf32>
      %18 = vector.shape_cast %17 : vector<1xf32> to vector<1x1x1xf32>
      %19 = vector.extract %18[0, 0, 0] : f32 from vector<1x1x1xf32>
      %c0_13 = arith.constant 0 : index
      %c0_14 = arith.constant 0 : index
      %20 = memref.load %arg4[%c0_13, %c0_14] : memref<1x1xf32, #tpu.memory_space<smem>>
      memref.store %19, %arg4[%c0_13, %c0_14] : memref<1x1xf32, #tpu.memory_space<smem>>
    } else {
    }
    return
  }
  func.func @transform_0(%arg0: i32, %arg1: i32) -> (i32, i32) {
    %c1_i32 = arith.constant 1 : i32
    %0 = arith.muli %arg0, %c1_i32 : i32
    %1 = arith.addi %0, %arg1 : i32
    %c0_i32 = arith.constant 0 : i32
    %c0_i32_0 = arith.constant 0 : i32
    return %1, %c0_i32 : i32, i32
  }
  func.func @transform_1(%arg0: i32, %arg1: i32) -> (i32, i32) {
    %c1_i32 = arith.constant 1 : i32
    %0 = arith.muli %arg0, %c1_i32 : i32
    %1 = arith.addi %0, %arg1 : i32
    %c0_i32 = arith.constant 0 : i32
    %c0_i32_0 = arith.constant 0 : i32
    return %1, %c0_i32 : i32, i32
  }
  func.func @transform_2(%arg0: i32, %arg1: i32) -> (i32, i32) {
    %c0_i32 = arith.constant 0 : i32
    %c0_i32_0 = arith.constant 0 : i32
    return %arg0, %c0_i32 : i32, i32
  }
}

</mosaic_0001>

<llo_original>
// kernel: tpu_custom_call.1
$region0: #{tpu_custom_call.1}
  #allocation0 [shape = 'u32[]', space=smem, size = 0x4, offset = 0x4, fixed_abs, tag = 'smem constant byte address 0x4 - core index']
  #allocation1 [shape = 'u32[72,128]{1,0:T(1,128)}', space=vmem, size = 0x9000, scoped, tag = 'internal scratch']
  #allocation2 [shape = 'f32[8,128]{1,0:T(8,128)}', space=vmem, size = 0x1000, scoped, tag = 'scratch operand']
  %s0 = inlined_call_operand.hbm [shape: f32[16,128], index: 0, kind: input, shape index: {}]
  %s1 = inlined_call_operand.hbm [shape: f32[16,128], index: 1, kind: input, shape index: {}]
  %s2 = inlined_call_operand.hbm [shape: f32[1,1], index: 2, kind: output, shape index: {}]
  %s3 = sld [smem:[#allocation0]]
  $region34: #{tpu_custom_call.1} parent=0
    _
  %s5 = ssub.s32 1, %s3
  %s6 = scalar_select 0, %s5, %s3
  $region1: #{tpu_custom_call.1} parent=0
    #allocation3 [shape = 'u8[8192]{0}', space=vmem, size = 0x2000, scoped, tag = 'input window, operand 0, single buffered']
    #allocation4 [shape = 's32[1]{0}', space=sflag, size = 0x4, scoped, tag = 'scoped memory for tpu_custom_call.1']
    #allocation5 [shape = 's32[1]{0}', space=sflag, size = 0x4, scoped, tag = 'scoped memory for tpu_custom_call.1']
    #allocation6 [shape = 'u8[8192]{0}', space=vmem, size = 0x2000, scoped, tag = 'input window, operand 1, single buffered']
    #allocation7 [shape = 's32[1]{0}', space=sflag, size = 0x4, scoped, tag = 'scoped memory for tpu_custom_call.1']
    #allocation8 [shape = 'u8[512]{0}', space=smem, size = 0x200, scoped, tag = 'output window, operand 0, single buffered']
    %7 = vsyncpa [#allocation4], 0
    %8 = vsyncpa [#allocation7], 0
    %9 = vsyncpa [#allocation5], 0
    // Predicated region
    $region2: #{tpu_custom_call.1} parent=1 // pred_check
      _
    $region3: #{tpu_custom_call.1} parent=1 // pred_check_branch
      %11 = sbr.rel (0) target = $region5
    $region4: #{tpu_custom_call.1} parent=1 // pred_region
      %s12 = sadd.s32 0, 0
      %s13 = smul.u32 2, %s12
      %15 = vsyncadd [#allocation4], 0
      %s16 = smul.addr %s13, 8
      %s17 = scalar_lea.hbm %s0, %s16
      %s18 = sshll.u32 %s17, 4
      %s19 = int_to_ptr.hbm [resolvable:$true] %s18
      %s20 = sshll.u32 [#allocation3], 4
      %s21 = int_to_ptr.vmem [resolvable:$true] %s20
      %26 = dma.hbm_to_vmem [thread:$0]  %s19, 256, %s21, [#allocation4], 128, 128, 8
    $region5: #{tpu_custom_call.1} parent=1 // pred_fallthru
      _
    // Predicated region
    $region6: #{tpu_custom_call.1} parent=1 // pred_check
      _
    $region7: #{tpu_custom_call.1} parent=1 // pred_check_branch
      %28 = sbr.rel (0) target = $region9
    $region8: #{tpu_custom_call.1} parent=1 // pred_region
      %s29 = sadd.s32 0, 0
      %s30 = smul.u32 2, %s29
      %32 = vsyncadd [#allocation7], 0
      %s33 = smul.addr %s30, 8
      %s34 = scalar_lea.hbm %s1, %s33
      %s35 = sshll.u32 %s34, 4
      %s36 = int_to_ptr.hbm [resolvable:$true] %s35
      %s37 = sshll.u32 [#allocation6], 4
      %s38 = int_to_ptr.vmem [resolvable:$true] %s37
      %43 = dma.hbm_to_vmem [thread:$0]  %s36, 256, %s38, [#allocation7], 128, 128, 8
    $region9: #{tpu_custom_call.1} parent=1 // pred_fallthru
      _
    // Predicated region
    $region10: #{tpu_custom_call.1} parent=1 // pred_check
      _
    $region11: #{tpu_custom_call.1} parent=1 // pred_check_branch
      %45 = sbr.rel (0) target = $region13
    $region12: #{tpu_custom_call.1} parent=1 // pred_region
      %47 = dma.done [#allocation4], 256
    $region13: #{tpu_custom_call.1} parent=1 // pred_fallthru
      _
    // Predicated region
    $region14: #{tpu_custom_call.1} parent=1 // pred_check
      _
    $region15: #{tpu_custom_call.1} parent=1 // pred_check_branch
      %49 = sbr.rel (0) target = $region17
    $region16: #{tpu_custom_call.1} parent=1 // pred_region
      %51 = dma.done [#allocation7], 256
    $region17: #{tpu_custom_call.1} parent=1 // pred_fallthru
      _
    %s52 = sadd.s32 0, 0
    %s53 = smul.u32 2, %s52
    %s54 = sadd.s32 0, 0
    %s55 = smul.u32 2, %s54
    %p56 = scmp.eq.s32.totalorder 0, 0
    // Predicated region
    $region18: #{tpu_custom_call.1} parent=1 // pred_check
      %p57 = pneg %p56
    $region19: #{tpu_custom_call.1} parent=1 // pred_check_branch
      %59 = sbr.rel (%p57) target = $region21
    $region20: #{tpu_custom_call.1} parent=1 // pred_region
      %60 = vst [vmem:[#allocation2] sm:$0xff] 0.0
    $region21: #{tpu_custom_call.1} parent=1 // pred_fallthru
      _
    %v61 = vld [vmem:[#allocation3] sm:$0xff]
    %v62 = vld [vmem:[#allocation3 + $0x8] sm:$0xff]
    %v63 = vld [vmem:[#allocation6] sm:$0xff]
    %v64 = vld [vmem:[#allocation6 + $0x8] sm:$0xff]
    %v65 = vsub.f32 %v61, %v63
    %v66 = vsub.f32 %v62, %v64
    %v67 = vmul.f32 %v65, %v65
    %v68 = vmul.f32 %v66, %v66
    %v69 = vld [vmem:[#allocation2] sm:$0xff]
    %v70 = vadd.f32 %v67, %v68
    %v71 = vadd.f32 %v69, %v70
    %72 = vst [vmem:[#allocation2] sm:$0xff] %v71
    // Predicated region
    $region22: #{tpu_custom_call.1} parent=1 // pred_check
      %p73 = pneg %p56
    $region23: #{tpu_custom_call.1} parent=1 // pred_check_branch
      %75 = sbr.rel (%p73) target = $region25
    $region24: #{tpu_custom_call.1} parent=1 // pred_region
      %v76 = vld [vmem:[#allocation2] sm:$0xff]
      %77 = vadd.xlane.f32.xlu0 %v76
      %v78 = vpop.xlane.xlu0 %77
      %v79 = vrot.slane %v78, 4
      %v80 = vadd.f32 %v78, %v79
      %v81 = vrot.slane %v80, 2
      %v82 = vadd.f32 %v80, %v81
      %v83 = vrot.slane %v82, 1
      %v84 = vadd.f32 %v82, %v83
      %s85 = vtos %v84
      %s86 = scalar_lea.smem [#allocation8], 0
      %87 = sst [smem:[%s86]] %s85
    $region25: #{tpu_custom_call.1} parent=1 // pred_fallthru
      _
    // Predicated region
    $region26: #{tpu_custom_call.1} parent=1 // pred_check
      _
    $region27: #{tpu_custom_call.1} parent=1 // pred_check_branch
      %89 = sbr.rel (0) target = $region29
    $region28: #{tpu_custom_call.1} parent=1 // pred_region
      %91 = vsyncadd [#allocation5], 0
      %s93 = sshll.u32 %s2, 4
      %s94 = int_to_ptr.hbm [resolvable:$true] %s93
      %96 = dma.smem_to_hbm [#allocation8], 16, %s94, [#allocation5]
    $region29: #{tpu_custom_call.1} parent=1 // pred_fallthru
      _
    // Predicated region
    $region30: #{tpu_custom_call.1} parent=1 // pred_check
      _
    $region31: #{tpu_custom_call.1} parent=1 // pred_check_branch
      %98 = sbr.rel (0) target = $region33
    $region32: #{tpu_custom_call.1} parent=1 // pred_region
      %100 = dma.done [#allocation5], 16
    $region33: #{tpu_custom_call.1} parent=1 // pred_fallthru
      _
    %101 = sfence
    %102 = vsyncpa [#allocation4], 1
    %103 = vsyncpa [#allocation7], 1
    %104 = vsyncpa [#allocation5], 1

</llo_original>
